<compile_context>
chip_gen: v6e
topology: v6e:2x2x1
jax: 0.10.0
libtpu: 0.0.40
codegen_flags: <defaults>
</compile_context>

<pallas_src>
import math

import jax
import jax.numpy as jnp
from jax.experimental import pallas as pl
from jax.experimental.pallas import tpu as pltpu


# --------------------------------------------------------------------------
# Pallas kernels
# --------------------------------------------------------------------------
def _colnorm_store(a, colsel, bcast, o_ref):
    """Column-L2 normalization of the flat adjacency a (NB, V*V) -> o_ref."""
    # d_small[n, j] = sum_{p : p % V == j} a[n, p]^2   (column sums of the VxV view)
    d_small = jnp.dot(a * a, colsel, preferred_element_type=jnp.float32)   # (NB, V)
    # broadcast back to the flat layout: dbig[n, p] = d_small[n, p % V]
    dbig = jnp.dot(d_small, bcast, preferred_element_type=jnp.float32)     # (NB, V*V)
    o_ref[...] = (a * jax.lax.rsqrt(dbig)).astype(o_ref.dtype)


def _cen_fused_kernel(x_ref, wbig_ref, b2_ref, colsel_ref, bcast_ref, o_ref):
    # Whole pre-normalization path = one MXU matmul on a lane-dense x slab.
    a = jnp.dot(x_ref[...], wbig_ref[...],
                preferred_element_type=jnp.float32) + b2_ref[...]          # (NB, V*V)
    _colnorm_store(a, colsel_ref[...], bcast_ref[...], o_ref)


def _cen_twostage_kernel(x_ref, wred_ref, shift_ref, wvt_ref, bv_ref,
                         colsel_ref, bcast_ref, o_ref):
    # Fallback when a resident (C*T*V, V*V) weight would not fit comfortably in VMEM.
    z = jnp.dot(x_ref[...], wred_ref[...],
                preferred_element_type=jnp.float32) + shift_ref[...]       # (NB, V)
    a = jnp.dot(z, wvt_ref[...],
                preferred_element_type=jnp.float32) + bv_ref[...]          # (NB, V*V)
    _colnorm_store(a, colsel_ref[...], bcast_ref[...], o_ref)


# --------------------------------------------------------------------------
# Sizing helpers (physical-VMEM aware)
# --------------------------------------------------------------------------
def _round_up(v, m):
    return -(-v // m) * m


def _padded_bytes(shape, itemsize):
    """Approx physical VMEM bytes of one buffer of `shape` under (8,128) tiling."""
    if len(shape) == 0:
        return 4 * 8 * 128
    if len(shape) == 1:
        rows, cols = 1, shape[0]
    else:
        rows, cols = math.prod(shape[:-1]), shape[-1]
    return _round_up(rows, 8) * _round_up(cols, 128) * itemsize


def _pick_nb(n, per_sample_bytes, budget_bytes):
    """Largest batch block that fits the per-step budget (no forced splitting)."""
    nb = max(1, budget_bytes // max(per_sample_bytes, 1))
    if nb >= n:
        return n
    # block's second-to-last dim must be a multiple of 8 (or the full extent)
    nb = max(8, (nb // 8) * 8)
    return min(nb, n)


def _vmem_capacity_bytes(default=64 << 20):
    try:
        return int(pltpu.get_tpu_info().vmem_capacity_bytes)
    except Exception:  # best-effort hardware query
        return default


# --------------------------------------------------------------------------
# Wrapper
# --------------------------------------------------------------------------
def cen_forward(x, params, *,
                fused_weight_budget_bytes=8 << 20,
                x_block_budget_bytes=2 << 20):
    wc, bc, wt, bt, gamma, beta, rmean, rvar, eps, wv, bv = params
    N, C, T, V = x.shape
    CTV, V2 = C * T * V, V * V
    f32 = jnp.float32

    # ---- one-time parameter folding (outside the per-sample hot path) ----
    bn_scale = (gamma / jnp.sqrt(rvar + eps)).astype(f32)            # (V,)
    bn_shift = (beta - rmean * bn_scale).astype(f32)                 # (V,)
    bias_ct = (bc * jnp.sum(wt) + bt).astype(f32)                    # scalar
    shift = bn_scale * bias_ct + bn_shift                            # (V,)
    wvt = wv.T.astype(f32)                                           # (V, V*V)
    w_ctv = (wc[:, None, None] * wt[None, :, None]
             * bn_scale[None, None, :]).astype(f32)                  # (C, T, V)

    # 0/1 column selector / broadcaster for the L2 normalization
    colsel = (jnp.arange(V2)[:, None] % V ==
              jnp.arange(V)[None, :]).astype(f32)                    # (V*V, V)
    bcast = colsel.T                                                 # (V, V*V)

    x_flat = x.reshape(N, CTV)                                       # lane-dense view
    out_dtype = x.dtype

    use_fused = CTV * V2 * 4 <= fused_weight_budget_bytes
    if use_fused:
        # Wbig[(c,t,v), p] = wc[c]*wt[t]*bn_scale[v]*wv[p, v]
        wbig = (w_ctv[..., None] * wvt[None, None, :, :]).reshape(CTV, V2)
        b2 = (shift @ wvt + bv).reshape(1, V2).astype(f32)           # (1, V*V)
        consts = (wbig, b2, colsel, bcast)
        kernel = _cen_fused_kernel
    else:
        eye_v = jnp.eye(V, dtype=f32)
        wred = (w_ctv[..., None] * eye_v[None, None, :, :]).reshape(CTV, V)
        consts = (wred, shift.reshape(1, V).astype(f32), wvt,
                  bv.reshape(1, V2).astype(f32), colsel, bcast)
        kernel = _cen_twostage_kernel

    # ---- physical VMEM accounting: lane padding, double buffering, temporaries ----
    per_sample = (2 * _round_up(CTV, 128) * x.dtype.itemsize        # x block, 2 bufs
                  + 2 * _round_up(V2, 128) * x.dtype.itemsize       # out block, 2 bufs
                  + 5 * _round_up(V2, 128) * 4)                     # f32 temporaries
    nb = _pick_nb(N, per_sample, x_block_budget_bytes)
    grid = (pl.cdiv(N, nb),)

    const_bytes = sum(2 * _padded_bytes(a.shape, 4) for a in consts)
    vmem_need = const_bytes + nb * per_sample
    vmem_limit = int(min(max(2 * vmem_need, 16 << 20),
                         _vmem_capacity_bytes() - (16 << 20),
                         48 << 20))

    def _const_spec(arr):
        zeros = (0,) * arr.ndim
        return pl.BlockSpec(arr.shape, lambda n, _z=zeros: _z)

    out_flat = pl.pallas_call(
        kernel,
        out_shape=jax.ShapeDtypeStruct((N, V2), out_dtype),
        grid_spec=pltpu.PrefetchScalarGridSpec(
            num_scalar_prefetch=0,
            grid=grid,
            in_specs=[pl.BlockSpec((nb, CTV), lambda n: (n, 0))]
                     + [_const_spec(a) for a in consts],
            out_specs=pl.BlockSpec((nb, V2), lambda n: (n, 0)),
        ),
        compiler_params=pltpu.CompilerParams(
            dimension_semantics=("parallel",),
            vmem_limit_bytes=vmem_limit),
    )(x_flat, *consts)

    return out_flat.reshape(N, V, V)


# --------------------------------------------------------------------------
# Pure-JAX reference (mirrors the PyTorch forward, BN in eval mode)
# --------------------------------------------------------------------------
def cen_ref(x, params):
    wc, bc, wt, bt, gamma, beta, rmean, rvar, eps, wv, bv = params
    N, C, T, V = x.shape
    y = jnp.einsum('nctv,c->ntv', x, wc) + bc                 # conv_c (1x1, C->1)
    y = jnp.einsum('ntv,t->nv', y, wt) + bt                   # permute + conv_t (T->1)
    y = (y - rmean) * (gamma / jnp.sqrt(rvar + eps)) + beta   # BatchNorm2d(V), eval
    a = y @ wv.T + bv                                         # conv_v (V -> V*V)
    A = a.reshape(N, V, V)
    d = jnp.sum(A * A, axis=1, keepdims=True)                 # (N, 1, V)
    return A / jnp.sqrt(d)


# --------------------------------------------------------------------------
# Deterministic parameter init
# --------------------------------------------------------------------------
def init_params(key, in_channels, num_joints, clip_len, eps=1e-5):
    C, V, T = in_channels, num_joints, clip_len
    ks = jax.random.split(key, 10)
    wc = jax.random.normal(ks[0], (C,), jnp.float32) / math.sqrt(C)
    bc = 0.1 * jax.random.normal(ks[1], (), jnp.float32)
    wt = jax.random.normal(ks[2], (T,), jnp.float32) / math.sqrt(T)
    bt = 0.1 * jax.random.normal(ks[3], (), jnp.float32)
    gamma = 1.0 + 0.1 * jax.random.normal(ks[4], (V,), jnp.float32)
    beta = 0.1 * jax.random.normal(ks[5], (V,), jnp.float32)
    rmean = 0.1 * jax.random.normal(ks[6], (V,), jnp.float32)
    rvar = 1.0 + 0.1 * jnp.abs(jax.random.normal(ks[7], (V,), jnp.float32))
    wv = jax.random.normal(ks[8], (V * V, V), jnp.float32) / math.sqrt(V)
    bv = 0.1 * jax.random.normal(ks[9], (V * V,), jnp.float32)
    return (wc, bc, wt, bt, gamma, beta, rmean, rvar, eps, wv, bv)


if __name__ == "__main__":
    N, C, T, V = 4, 4, 16, 16      # batch, in_channels, clip_len, num_joints

    key = jax.random.PRNGKey(0)
    k_param, k_x = jax.random.split(key)
    params = init_params(k_param, in_channels=C, num_joints=V, clip_len=T)
    x = jax.random.normal(k_x, (N, C, T, V), jnp.float32)

    ref = cen_ref(x, params)

    # primary path: single fused MXU matmul
    out = jax.block_until_ready(cen_forward(x, params))
    assert out.shape == (N, V, V)
    err = float(jnp.max(jnp.abs(out - ref)))
    assert err < 1e-3, f"fused path mismatch vs reference: max abs err {err}"

    # fallback path (two-stage), forced for coverage
    out2 = jax.block_until_ready(
        cen_forward(x, params, fused_weight_budget_bytes=0))
    err2 = float(jnp.max(jnp.abs(out2 - ref)))
    assert err2 < 1e-3, f"two-stage path mismatch vs reference: max abs err {err2}"

    print("KERNEL_OK")
</pallas_src>

<mosaic_0001>
module attributes {stable_mosaic.version = 11 : i64} {
  func.func @_cen_fused_kernel(%arg0: i32, %arg1: memref<4x1024xf32, #tpu.memory_space<vmem>>, %arg2: memref<1024x256xf32, #tpu.memory_space<vmem>>, %arg3: memref<1x256xf32, #tpu.memory_space<vmem>>, %arg4: memref<256x16xf32, #tpu.memory_space<vmem>>, %arg5: memref<16x256xf32, #tpu.memory_space<vmem>>, %arg6: memref<4x256xf32, #tpu.memory_space<vmem>>) attributes {dimension_semantics = [#tpu.dimension_semantics<parallel>], iteration_bounds = array<i64: 1>, scalar_prefetch = 0 : i64, scratch_operands = 0 : i64, tpu.core_type = #tpu.core_type<tc>, window_params = [{transform_indices = @transform_0, window_bounds = array<i64: 4, 1024>}, {pipeline_mode = #tpu.pipeline_mode<synchronous>, transform_indices = @transform_1, window_bounds = array<i64: 1024, 256>}, {pipeline_mode = #tpu.pipeline_mode<synchronous>, transform_indices = @transform_2, window_bounds = array<i64: 1, 256>}, {pipeline_mode = #tpu.pipeline_mode<synchronous>, transform_indices = @transform_3, window_bounds = array<i64: 256, 16>}, {pipeline_mode = #tpu.pipeline_mode<synchronous>, transform_indices = @transform_4, window_bounds = array<i64: 16, 256>}, {transform_indices = @transform_5, window_bounds = array<i64: 4, 256>}]} {
    %c0 = arith.constant 0 : index
    %c0_0 = arith.constant 0 : index
    %0 = vector.load %arg1[%c0, %c0_0] : memref<4x1024xf32, #tpu.memory_space<vmem>>, vector<4x1024xf32>
    %c0_1 = arith.constant 0 : index
    %c0_2 = arith.constant 0 : index
    %1 = vector.load %arg2[%c0_1, %c0_2] : memref<1024x256xf32, #tpu.memory_space<vmem>>, vector<1024x256xf32>
    %cst = arith.constant dense<0.000000e+00> : vector<4x256xf32>
    %2 = tpu.matmul %0, %1, %cst {dimension_numbers = #tpu.dot_dimension_numbers<[1], [0], [0], [1], [0, 0, 1, 1], [], []>} : vector<4x1024xf32>, vector<1024x256xf32>, vector<4x256xf32> -> vector<4x256xf32>
    %c0_3 = arith.constant 0 : index
    %c0_4 = arith.constant 0 : index
    %3 = vector.load %arg3[%c0_3, %c0_4] : memref<1x256xf32, #tpu.memory_space<vmem>>, vector<1x256xf32>
    %4 = vector.broadcast %3 : vector<1x256xf32> to vector<4x256xf32>
    %5 = arith.addf %2, %4 : vector<4x256xf32>
    %c0_5 = arith.constant 0 : index
    %c0_6 = arith.constant 0 : index
    %6 = vector.load %arg4[%c0_5, %c0_6] : memref<256x16xf32, #tpu.memory_space<vmem>>, vector<256x16xf32>
    %c0_7 = arith.constant 0 : index
    %c0_8 = arith.constant 0 : index
    %7 = vector.load %arg5[%c0_7, %c0_8] : memref<16x256xf32, #tpu.memory_space<vmem>>, vector<16x256xf32>
    %8 = arith.mulf %5, %5 : vector<4x256xf32>
    %cst_9 = arith.constant dense<0.000000e+00> : vector<4x16xf32>
    %9 = tpu.matmul %8, %6, %cst_9 {dimension_numbers = #tpu.dot_dimension_numbers<[1], [0], [0], [1], [0, 0, 1, 1], [], []>} : vector<4x256xf32>, vector<256x16xf32>, vector<4x16xf32> -> vector<4x16xf32>
    %cst_10 = arith.constant dense<0.000000e+00> : vector<4x256xf32>
    %10 = tpu.matmul %9, %7, %cst_10 {dimension_numbers = #tpu.dot_dimension_numbers<[1], [0], [0], [1], [0, 0, 1, 1], [], []>} : vector<4x16xf32>, vector<16x256xf32>, vector<4x256xf32> -> vector<4x256xf32>
    %11 = math.rsqrt %10 : vector<4x256xf32>
    %12 = arith.mulf %5, %11 : vector<4x256xf32>
    %c0_11 = arith.constant 0 : index
    %c0_12 = arith.constant 0 : index
    %13 = vector.load %arg6[%c0_11, %c0_12] : memref<4x256xf32, #tpu.memory_space<vmem>>, vector<4x256xf32>
    tpu.vector_store %arg6[%c0_11, %c0_12], %12 {strides = array<i32>} : memref<4x256xf32, #tpu.memory_space<vmem>>, vector<4x256xf32>,
    return
  }
  func.func @transform_0(%arg0: i32) -> (i32, i32) {
    %c0_i32 = arith.constant 0 : i32
    %c0_i32_0 = arith.constant 0 : i32
    return %arg0, %c0_i32 : i32, i32
  }
  func.func @transform_1(%arg0: i32) -> (i32, i32) {
    %c0_i32 = arith.constant 0 : i32
    %c0_i32_0 = arith.constant 0 : i32
    %c0_i32_1 = arith.constant 0 : i32
    return %c0_i32, %c0_i32_0 : i32, i32
  }
  func.func @transform_2(%arg0: i32) -> (i32, i32) {
    %c0_i32 = arith.constant 0 : i32
    %c0_i32_0 = arith.constant 0 : i32
    %c0_i32_1 = arith.constant 0 : i32
    return %c0_i32, %c0_i32_0 : i32, i32
  }
  func.func @transform_3(%arg0: i32) -> (i32, i32) {
    %c0_i32 = arith.constant 0 : i32
    %c0_i32_0 = arith.constant 0 : i32
    %c0_i32_1 = arith.constant 0 : i32
    return %c0_i32, %c0_i32_0 : i32, i32
  }
  func.func @transform_4(%arg0: i32) -> (i32, i32) {
    %c0_i32 = arith.constant 0 : i32
    %c0_i32_0 = arith.constant 0 : i32
    %c0_i32_1 = arith.constant 0 : i32
    return %c0_i32, %c0_i32_0 : i32, i32
  }
  func.func @transform_5(%arg0: i32) -> (i32, i32) {
    %c0_i32 = arith.constant 0 : i32
    %c0_i32_0 = arith.constant 0 : i32
    return %arg0, %c0_i32 : i32, i32
  }
}

</mosaic_0001>

<llo_original>
// kernel: tpu_custom_call.1
$region0: #{tpu_custom_call.1}
  #allocation0 [shape = 'u32[]', space=smem, size = 0x4, offset = 0x4, fixed_abs, tag = 'smem constant byte address 0x4 - core index']
  #allocation1 [shape = 'u32[144,128]{1,0:T(1,128)}', space=vmem, size = 0x12000, scoped, tag = 'internal scratch']
  %s0 = inlined_call_operand.vmem [shape: f32[4,1024], index: 0, kind: input, shape index: {}]
  %s1 = inlined_call_operand.hbm [shape: f32[1024,256], index: 1, kind: input, shape index: {}]
  %s2 = inlined_call_operand.vmem [shape: f32[1,256], index: 2, kind: input, shape index: {}]
  %s3 = inlined_call_operand.vmem [shape: f32[256,16], index: 3, kind: input, shape index: {}]
  %s4 = inlined_call_operand.vmem [shape: f32[16,256], index: 4, kind: input, shape index: {}]
  %s5 = inlined_call_operand.hbm [shape: f32[4,256], index: 5, kind: output, shape index: {}]
  %s6 = sld [smem:[#allocation0]]
  $region34: #{tpu_custom_call.1} parent=0
    _
  %s8 = ssub.s32 1, %s6
  %s9 = scalar_select 0, %s8, %s6
  $region1: #{tpu_custom_call.1} parent=0
    #allocation2 [shape = 'u8[1048576]{0}', space=vmem, size = 0x100000, scoped, tag = 'input window, operand 1, single buffered']
    #allocation3 [shape = 's32[1]{0}', space=sflag, size = 0x4, scoped, tag = 'scoped memory for tpu_custom_call.1']
    #allocation4 [shape = 's32[1]{0}', space=sflag, size = 0x4, scoped, tag = 'scoped memory for tpu_custom_call.1']
    #allocation5 [shape = 'u8[4096]{0}', space=vmem, size = 0x1000, scoped, tag = 'output window, operand 0, single buffered']
    %10 = vsyncpa [#allocation3], 0
    %11 = vsyncpa [#allocation4], 0
    // Predicated region
    $region2: #{tpu_custom_call.1} parent=1 // pred_check
      _
    $region3: #{tpu_custom_call.1} parent=1 // pred_check_branch
      %13 = sbr.rel (0) target = $region5
    $region4: #{tpu_custom_call.1} parent=1 // pred_region
      _
    $region5: #{tpu_custom_call.1} parent=1 // pred_fallthru
      _
    // Predicated region
    $region6: #{tpu_custom_call.1} parent=1 // pred_check
      _
    $region7: #{tpu_custom_call.1} parent=1 // pred_check_branch
      %15 = sbr.rel (0) target = $region9
    $region8: #{tpu_custom_call.1} parent=1 // pred_region
      %s17 = ssub.s32 32768, 32768
      %18 = vsyncadd [#allocation3], %s17
      %s19 = sshll.u32 [#allocation2], 4
      %s20 = int_to_ptr.vmem [resolvable:$true] %s19
      %25 = dma.hbm_to_vmem [thread:$0]  %s1, 32768, %s20, [#allocation3], 256, 256, 16
    $region9: #{tpu_custom_call.1} parent=1 // pred_fallthru
      _
    // Predicated region
    $region10: #{tpu_custom_call.1} parent=1 // pred_check
      _
    $region11: #{tpu_custom_call.1} parent=1 // pred_check_branch
      %27 = sbr.rel (0) target = $region13
    $region12: #{tpu_custom_call.1} parent=1 // pred_region
      _
    $region13: #{tpu_custom_call.1} parent=1 // pred_fallthru
      _
    // Predicated region
    $region14: #{tpu_custom_call.1} parent=1 // pred_check
      _
    $region15: #{tpu_custom_call.1} parent=1 // pred_check_branch
      %29 = sbr.rel (0) target = $region17
    $region16: #{tpu_custom_call.1} parent=1 // pred_region
      _
    $region17: #{tpu_custom_call.1} parent=1 // pred_fallthru
      _
    // Predicated region
    $region18: #{tpu_custom_call.1} parent=1 // pred_check
      _
    $region19: #{tpu_custom_call.1} parent=1 // pred_check_branch
      %31 = sbr.rel (0) target = $region21
    $region20: #{tpu_custom_call.1} parent=1 // pred_region
      _
    $region21: #{tpu_custom_call.1} parent=1 // pred_fallthru
      _
    // Predicated region
    $region22: #{tpu_custom_call.1} parent=1 // pred_check
      _
    $region23: #{tpu_custom_call.1} parent=1 // pred_check_branch
      %33 = sbr.rel (0) target = $region25
    $region24: #{tpu_custom_call.1} parent=1 // pred_region
      %34 = dma.done [#allocation3], 32768
    $region25: #{tpu_custom_call.1} parent=1 // pred_fallthru
      _
    %v35 = vld [vmem:[%s0] sm:$0xff]
    %v36 = vld [vmem:[%s0 + $0x8] sm:$0xff]
    %v37 = vld [vmem:[%s0 + $0x10] sm:$0xff]
    %v38 = vld [vmem:[%s0 + $0x18] sm:$0xff]
    %v39 = vld [vmem:[#allocation2] sm:$0xff]
    %v40 = vld [vmem:[#allocation2 + $0x8] sm:$0xff]
    %v41 = vld [vmem:[#allocation2 + $0x10] sm:$0xff]
    %v42 = vld [vmem:[#allocation2 + $0x18] sm:$0xff]
    %v43 = vld [vmem:[#allocation2 + $0x20] sm:$0xff]
    %v44 = vld [vmem:[#allocation2 + $0x28] sm:$0xff]
    %v45 = vld [vmem:[#allocation2 + $0x30] sm:$0xff]
    %v46 = vld [vmem:[#allocation2 + $0x38] sm:$0xff]
    %v47 = vld [vmem:[#allocation2 + $0x40] sm:$0xff]
    %v48 = vld [vmem:[#allocation2 + $0x48] sm:$0xff]
    %v49 = vld [vmem:[#allocation2 + $0x50] sm:$0xff]
    %v50 = vld [vmem:[#allocation2 + $0x58] sm:$0xff]
    %v51 = vld [vmem:[#allocation2 + $0x60] sm:$0xff]
    %v52 = vld [vmem:[#allocation2 + $0x68] sm:$0xff]
    %v53 = vld [vmem:[#allocation2 + $0x70] sm:$0xff]
    %v54 = vld [vmem:[#allocation2 + $0x78] sm:$0xff]
    %v55 = vld [vmem:[#allocation2 + $0x80] sm:$0xff]
    %v56 = vld [vmem:[#allocation2 + $0x88] sm:$0xff]
    %v57 = vld [vmem:[#allocation2 + $0x90] sm:$0xff]
    %v58 = vld [vmem:[#allocation2 + $0x98] sm:$0xff]
    %v59 = vld [vmem:[#allocation2 + $0xa0] sm:$0xff]
    %v60 = vld [vmem:[#allocation2 + $0xa8] sm:$0xff]
    %v61 = vld [vmem:[#allocation2 + $0xb0] sm:$0xff]
    %v62 = vld [vmem:[#allocation2 + $0xb8] sm:$0xff]
    %v63 = vld [vmem:[#allocation2 + $0xc0] sm:$0xff]
    %v64 = vld [vmem:[#allocation2 + $0xc8] sm:$0xff]
    %v65 = vld [vmem:[#allocation2 + $0xd0] sm:$0xff]
    %v66 = vld [vmem:[#allocation2 + $0xd8] sm:$0xff]
    %v67 = vld [vmem:[#allocation2 + $0xe0] sm:$0xff]
    %v68 = vld [vmem:[#allocation2 + $0xe8] sm:$0xff]
    %v69 = vld [vmem:[#allocation2 + $0xf0] sm:$0xff]
    %v70 = vld [vmem:[#allocation2 + $0xf8] sm:$0xff]
    %v71 = vld [vmem:[#allocation2 + $0x100] sm:$0xff]
    %v72 = vld [vmem:[#allocation2 + $0x108] sm:$0xff]
    %v73 = vld [vmem:[#allocation2 + $0x110] sm:$0xff]
    %v74 = vld [vmem:[#allocation2 + $0x118] sm:$0xff]
    %v75 = vld [vmem:[#allocation2 + $0x120] sm:$0xff]
    %v76 = vld [vmem:[#allocation2 + $0x128] sm:$0xff]
    %v77 = vld [vmem:[#allocation2 + $0x130] sm:$0xff]
    %v78 = vld [vmem:[#allocation2 + $0x138] sm:$0xff]
    %v79 = vld [vmem:[#allocation2 + $0x140] sm:$0xff]
    %v80 = vld [vmem:[#allocation2 + $0x148] sm:$0xff]
    %v81 = vld [vmem:[#allocation2 + $0x150] sm:$0xff]
    %v82 = vld [vmem:[#allocation2 + $0x158] sm:$0xff]
    %v83 = vld [vmem:[#allocation2 + $0x160] sm:$0xff]
    %v84 = vld [vmem:[#allocation2 + $0x168] sm:$0xff]
    %v85 = vld [vmem:[#allocation2 + $0x170] sm:$0xff]
    %v86 = vld [vmem:[#allocation2 + $0x178] sm:$0xff]
    %v87 = vld [vmem:[#allocation2 + $0x180] sm:$0xff]
    %v88 = vld [vmem:[#allocation2 + $0x188] sm:$0xff]
    %v89 = vld [vmem:[#allocation2 + $0x190] sm:$0xff]
    %v90 = vld [vmem:[#allocation2 + $0x198] sm:$0xff]
    %v91 = vld [vmem:[#allocation2 + $0x1a0] sm:$0xff]
    %v92 = vld [vmem:[#allocation2 + $0x1a8] sm:$0xff]
    %v93 = vld [vmem:[#allocation2 + $0x1b0] sm:$0xff]
    %v94 = vld [vmem:[#allocation2 + $0x1b8] sm:$0xff]
    %v95 = vld [vmem:[#allocation2 + $0x1c0] sm:$0xff]
    %v96 = vld [vmem:[#allocation2 + $0x1c8] sm:$0xff]
    %v97 = vld [vmem:[#allocation2 + $0x1d0] sm:$0xff]
    %v98 = vld [vmem:[#allocation2 + $0x1d8] sm:$0xff]
    %v99 = vld [vmem:[#allocation2 + $0x1e0] sm:$0xff]
    %v100 = vld [vmem:[#allocation2 + $0x1e8] sm:$0xff]
    %v101 = vld [vmem:[#allocation2 + $0x1f0] sm:$0xff]
    %v102 = vld [vmem:[#allocation2 + $0x1f8] sm:$0xff]
    %v103 = vld [vmem:[#allocation2 + $0x200] sm:$0xff]
    %v104 = vld [vmem:[#allocation2 + $0x208] sm:$0xff]
    %v105 = vld [vmem:[#allocation2 + $0x210] sm:$0xff]
    %v106 = vld [vmem:[#allocation2 + $0x218] sm:$0xff]
    %v107 = vld [vmem:[#allocation2 + $0x220] sm:$0xff]
    %v108 = vld [vmem:[#allocation2 + $0x228] sm:$0xff]
    %v109 = vld [vmem:[#allocation2 + $0x230] sm:$0xff]
    %v110 = vld [vmem:[#allocation2 + $0x238] sm:$0xff]
    %v111 = vld [vmem:[#allocation2 + $0x240] sm:$0xff]
    %v112 = vld [vmem:[#allocation2 + $0x248] sm:$0xff]
    %v113 = vld [vmem:[#allocation2 + $0x250] sm:$0xff]
    %v114 = vld [vmem:[#allocation2 + $0x258] sm:$0xff]
    %v115 = vld [vmem:[#allocation2 + $0x260] sm:$0xff]
    %v116 = vld [vmem:[#allocation2 + $0x268] sm:$0xff]
    %v117 = vld [vmem:[#allocation2 + $0x270] sm:$0xff]
    %v118 = vld [vmem:[#allocation2 + $0x278] sm:$0xff]
    %v119 = vld [vmem:[#allocation2 + $0x280] sm:$0xff]
    %v120 = vld [vmem:[#allocation2 + $0x288] sm:$0xff]
    %v121 = vld [vmem:[#allocation2 + $0x290] sm:$0xff]
    %v122 = vld [vmem:[#allocation2 + $0x298] sm:$0xff]
    %v123 = vld [vmem:[#allocation2 + $0x2a0] sm:$0xff]
    %v124 = vld [vmem:[#allocation2 + $0x2a8] sm:$0xff]
    %v125 = vld [vmem:[#allocation2 + $0x2b0] sm:$0xff]
    %v126 = vld [vmem:[#allocation2 + $0x2b8] sm:$0xff]
    %v127 = vld [vmem:[#allocation2 + $0x2c0] sm:$0xff]
    %v128 = vld [vmem:[#allocation2 + $0x2c8] sm:$0xff]
    %v129 = vld [vmem:[#allocation2 + $0x2d0] sm:$0xff]
    %v130 = vld [vmem:[#allocation2 + $0x2d8] sm:$0xff]
    %v131 = vld [vmem:[#allocation2 + $0x2e0] sm:$0xff]
    %v132 = vld [vmem:[#allocation2 + $0x2e8] sm:$0xff]
    %v133 = vld [vmem:[#allocation2 + $0x2f0] sm:$0xff]
    %v134 = vld [vmem:[#allocation2 + $0x2f8] sm:$0xff]
    %v135 = vld [vmem:[#allocation2 + $0x300] sm:$0xff]
    %v136 = vld [vmem:[#allocation2 + $0x308] sm:$0xff]
    %v137 = vld [vmem:[#allocation2 + $0x310] sm:$0xff]
    %v138 = vld [vmem:[#allocation2 + $0x318] sm:$0xff]
    %v139 = vld [vmem:[#allocation2 + $0x320] sm:$0xff]
    %v140 = vld [vmem:[#allocation2 + $0x328] sm:$0xff]
    %v141 = vld [vmem:[#allocation2 + $0x330] sm:$0xff]
    %v142 = vld [vmem:[#allocation2 + $0x338] sm:$0xff]
    %v143 = vld [vmem:[#allocation2 + $0x340] sm:$0xff]
    %v144 = vld [vmem:[#allocation2 + $0x348] sm:$0xff]
    %v145 = vld [vmem:[#allocation2 + $0x350] sm:$0xff]
    %v146 = vld [vmem:[#allocation2 + $0x358] sm:$0xff]
    %v147 = vld [vmem:[#allocation2 + $0x360] sm:$0xff]
    %v148 = vld [vmem:[#allocation2 + $0x368] sm:$0xff]
    %v149 = vld [vmem:[#allocation2 + $0x370] sm:$0xff]
    %v150 = vld [vmem:[#allocation2 + $0x378] sm:$0xff]
    %v151 = vld [vmem:[#allocation2 + $0x380] sm:$0xff]
    %v152 = vld [vmem:[#allocation2 + $0x388] sm:$0xff]
    %v153 = vld [vmem:[#allocation2 + $0x390] sm:$0xff]
    %v154 = vld [vmem:[#allocation2 + $0x398] sm:$0xff]
    %v155 = vld [vmem:[#allocation2 + $0x3a0] sm:$0xff]
    %v156 = vld [vmem:[#allocation2 + $0x3a8] sm:$0xff]
    %v157 = vld [vmem:[#allocation2 + $0x3b0] sm:$0xff]
    %v158 = vld [vmem:[#allocation2 + $0x3b8] sm:$0xff]
    %v159 = vld [vmem:[#allocation2 + $0x3c0] sm:$0xff]
    %v160 = vld [vmem:[#allocation2 + $0x3c8] sm:$0xff]
    %v161 = vld [vmem:[#allocation2 + $0x3d0] sm:$0xff]
    %v162 = vld [vmem:[#allocation2 + $0x3d8] sm:$0xff]
    %v163 = vld [vmem:[#allocation2 + $0x3e0] sm:$0xff]
    %v164 = vld [vmem:[#allocation2 + $0x3e8] sm:$0xff]
    %v165 = vld [vmem:[#allocation2 + $0x3f0] sm:$0xff]
    %v166 = vld [vmem:[#allocation2 + $0x3f8] sm:$0xff]
    %v167 = vld [vmem:[#allocation2 + $0x400] sm:$0xff]
    %v168 = vld [vmem:[#allocation2 + $0x408] sm:$0xff]
    %v169 = vld [vmem:[#allocation2 + $0x410] sm:$0xff]
    %v170 = vld [vmem:[#allocation2 + $0x418] sm:$0xff]
    %v171 = vld [vmem:[#allocation2 + $0x420] sm:$0xff]
    %v172 = vld [vmem:[#allocation2 + $0x428] sm:$0xff]
    %v173 = vld [vmem:[#allocation2 + $0x430] sm:$0xff]
    %v174 = vld [vmem:[#allocation2 + $0x438] sm:$0xff]
    %v175 = vld [vmem:[#allocation2 + $0x440] sm:$0xff]
    %v176 = vld [vmem:[#allocation2 + $0x448] sm:$0xff]
    %v177 = vld [vmem:[#allocation2 + $0x450] sm:$0xff]
    %v178 = vld [vmem:[#allocation2 + $0x458] sm:$0xff]
    %v179 = vld [vmem:[#allocation2 + $0x460] sm:$0xff]
    %v180 = vld [vmem:[#allocation2 + $0x468] sm:$0xff]
    %v181 = vld [vmem:[#allocation2 + $0x470] sm:$0xff]
    %v182 = vld [vmem:[#allocation2 + $0x478] sm:$0xff]
    %v183 = vld [vmem:[#allocation2 + $0x480] sm:$0xff]
    %v184 = vld [vmem:[#allocation2 + $0x488] sm:$0xff]
    %v185 = vld [vmem:[#allocation2 + $0x490] sm:$0xff]
    %v186 = vld [vmem:[#allocation2 + $0x498] sm:$0xff]
    %v187 = vld [vmem:[#allocation2 + $0x4a0] sm:$0xff]
    %v188 = vld [vmem:[#allocation2 + $0x4a8] sm:$0xff]
    %v189 = vld [vmem:[#allocation2 + $0x4b0] sm:$0xff]
    %v190 = vld [vmem:[#allocation2 + $0x4b8] sm:$0xff]
    %v191 = vld [vmem:[#allocation2 + $0x4c0] sm:$0xff]
    %v192 = vld [vmem:[#allocation2 + $0x4c8] sm:$0xff]
    %v193 = vld [vmem:[#allocation2 + $0x4d0] sm:$0xff]
    %v194 = vld [vmem:[#allocation2 + $0x4d8] sm:$0xff]
    %v195 = vld [vmem:[#allocation2 + $0x4e0] sm:$0xff]
    %v196 = vld [vmem:[#allocation2 + $0x4e8] sm:$0xff]
    %v197 = vld [vmem:[#allocation2 + $0x4f0] sm:$0xff]
    %v198 = vld [vmem:[#allocation2 + $0x4f8] sm:$0xff]
    %v199 = vld [vmem:[#allocation2 + $0x500] sm:$0xff]
    %v200 = vld [vmem:[#allocation2 + $0x508] sm:$0xff]
    %v201 = vld [vmem:[#allocation2 + $0x510] sm:$0xff]
    %v202 = vld [vmem:[#allocation2 + $0x518] sm:$0xff]
    %v203 = vld [vmem:[#allocation2 + $0x520] sm:$0xff]
    %v204 = vld [vmem:[#allocation2 + $0x528] sm:$0xff]
    %v205 = vld [vmem:[#allocation2 + $0x530] sm:$0xff]
    %v206 = vld [vmem:[#allocation2 + $0x538] sm:$0xff]
    %v207 = vld [vmem:[#allocation2 + $0x540] sm:$0xff]
    %v208 = vld [vmem:[#allocation2 + $0x548] sm:$0xff]
    %v209 = vld [vmem:[#allocation2 + $0x550] sm:$0xff]
    %v210 = vld [vmem:[#allocation2 + $0x558] sm:$0xff]
    %v211 = vld [vmem:[#allocation2 + $0x560] sm:$0xff]
    %v212 = vld [vmem:[#allocation2 + $0x568] sm:$0xff]
    %v213 = vld [vmem:[#allocation2 + $0x570] sm:$0xff]
    %v214 = vld [vmem:[#allocation2 + $0x578] sm:$0xff]
    %v215 = vld [vmem:[#allocation2 + $0x580] sm:$0xff]
    %v216 = vld [vmem:[#allocation2 + $0x588] sm:$0xff]
    %v217 = vld [vmem:[#allocation2 + $0x590] sm:$0xff]
    %v218 = vld [vmem:[#allocation2 + $0x598] sm:$0xff]
    %v219 = vld [vmem:[#allocation2 + $0x5a0] sm:$0xff]
    %v220 = vld [vmem:[#allocation2 + $0x5a8] sm:$0xff]
    %v221 = vld [vmem:[#allocation2 + $0x5b0] sm:$0xff]
    %v222 = vld [vmem:[#allocation2 + $0x5b8] sm:$0xff]
    %v223 = vld [vmem:[#allocation2 + $0x5c0] sm:$0xff]
    %v224 = vld [vmem:[#allocation2 + $0x5c8] sm:$0xff]
    %v225 = vld [vmem:[#allocation2 + $0x5d0] sm:$0xff]
    %v226 = vld [vmem:[#allocation2 + $0x5d8] sm:$0xff]
    %v227 = vld [vmem:[#allocation2 + $0x5e0] sm:$0xff]
    %v228 = vld [vmem:[#allocation2 + $0x5e8] sm:$0xff]
    %v229 = vld [vmem:[#allocation2 + $0x5f0] sm:$0xff]
    %v230 = vld [vmem:[#allocation2 + $0x5f8] sm:$0xff]
    %v231 = vld [vmem:[#allocation2 + $0x600] sm:$0xff]
    %v232 = vld [vmem:[#allocation2 + $0x608] sm:$0xff]
    %v233 = vld [vmem:[#allocation2 + $0x610] sm:$0xff]
    %v234 = vld [vmem:[#allocation2 + $0x618] sm:$0xff]
    %v235 = vld [vmem:[#allocation2 + $0x620] sm:$0xff]
    %v236 = vld [vmem:[#allocation2 + $0x628] sm:$0xff]
    %v237 = vld [vmem:[#allocation2 + $0x630] sm:$0xff]
    %v238 = vld [vmem:[#allocation2 + $0x638] sm:$0xff]
    %v239 = vld [vmem:[#allocation2 + $0x640] sm:$0xff]
    %v240 = vld [vmem:[#allocation2 + $0x648] sm:$0xff]
    %v241 = vld [vmem:[#allocation2 + $0x650] sm:$0xff]
    %v242 = vld [vmem:[#allocation2 + $0x658] sm:$0xff]
    %v243 = vld [vmem:[#allocation2 + $0x660] sm:$0xff]
    %v244 = vld [vmem:[#allocation2 + $0x668] sm:$0xff]
    %v245 = vld [vmem:[#allocation2 + $0x670] sm:$0xff]
    %v246 = vld [vmem:[#allocation2 + $0x678] sm:$0xff]
    %v247 = vld [vmem:[#allocation2 + $0x680] sm:$0xff]
    %v248 = vld [vmem:[#allocation2 + $0x688] sm:$0xff]
    %v249 = vld [vmem:[#allocation2 + $0x690] sm:$0xff]
    %v250 = vld [vmem:[#allocation2 + $0x698] sm:$0xff]
    %v251 = vld [vmem:[#allocation2 + $0x6a0] sm:$0xff]
    %v252 = vld [vmem:[#allocation2 + $0x6a8] sm:$0xff]
    %v253 = vld [vmem:[#allocation2 + $0x6b0] sm:$0xff]
    %v254 = vld [vmem:[#allocation2 + $0x6b8] sm:$0xff]
    %v255 = vld [vmem:[#allocation2 + $0x6c0] sm:$0xff]
    %v256 = vld [vmem:[#allocation2 + $0x6c8] sm:$0xff]
    %v257 = vld [vmem:[#allocation2 + $0x6d0] sm:$0xff]
    %v258 = vld [vmem:[#allocation2 + $0x6d8] sm:$0xff]
    %v259 = vld [vmem:[#allocation2 + $0x6e0] sm:$0xff]
    %v260 = vld [vmem:[#allocation2 + $0x6e8] sm:$0xff]
    %v261 = vld [vmem:[#allocation2 + $0x6f0] sm:$0xff]
    %v262 = vld [vmem:[#allocation2 + $0x6f8] sm:$0xff]
    %v263 = vld [vmem:[#allocation2 + $0x700] sm:$0xff]
    %v264 = vld [vmem:[#allocation2 + $0x708] sm:$0xff]
    %v265 = vld [vmem:[#allocation2 + $0x710] sm:$0xff]
    %v266 = vld [vmem:[#allocation2 + $0x718] sm:$0xff]
    %v267 = vld [vmem:[#allocation2 + $0x720] sm:$0xff]
    %v268 = vld [vmem:[#allocation2 + $0x728] sm:$0xff]
    %v269 = vld [vmem:[#allocation2 + $0x730] sm:$0xff]
    %v270 = vld [vmem:[#allocation2 + $0x738] sm:$0xff]
    %v271 = vld [vmem:[#allocation2 + $0x740] sm:$0xff]
    %v272 = vld [vmem:[#allocation2 + $0x748] sm:$0xff]
    %v273 = vld [vmem:[#allocation2 + $0x750] sm:$0xff]
    %v274 = vld [vmem:[#allocation2 + $0x758] sm:$0xff]
    %v275 = vld [vmem:[#allocation2 + $0x760] sm:$0xff]
    %v276 = vld [vmem:[#allocation2 + $0x768] sm:$0xff]
    %v277 = vld [vmem:[#allocation2 + $0x770] sm:$0xff]
    %v278 = vld [vmem:[#allocation2 + $0x778] sm:$0xff]
    %v279 = vld [vmem:[#allocation2 + $0x780] sm:$0xff]
    %v280 = vld [vmem:[#allocation2 + $0x788] sm:$0xff]
    %v281 = vld [vmem:[#allocation2 + $0x790] sm:$0xff]
    %v282 = vld [vmem:[#allocation2 + $0x798] sm:$0xff]
    %v283 = vld [vmem:[#allocation2 + $0x7a0] sm:$0xff]
    %v284 = vld [vmem:[#allocation2 + $0x7a8] sm:$0xff]
    %v285 = vld [vmem:[#allocation2 + $0x7b0] sm:$0xff]
    %v286 = vld [vmem:[#allocation2 + $0x7b8] sm:$0xff]
    %v287 = vld [vmem:[#allocation2 + $0x7c0] sm:$0xff]
    %v288 = vld [vmem:[#allocation2 + $0x7c8] sm:$0xff]
    %v289 = vld [vmem:[#allocation2 + $0x7d0] sm:$0xff]
    %v290 = vld [vmem:[#allocation2 + $0x7d8] sm:$0xff]
    %v291 = vld [vmem:[#allocation2 + $0x7e0] sm:$0xff]
    %v292 = vld [vmem:[#allocation2 + $0x7e8] sm:$0xff]
    %v293 = vld [vmem:[#allocation2 + $0x7f0] sm:$0xff]
    %v294 = vld [vmem:[#allocation2 + $0x7f8] sm:$0xff]
    %v295 = vld [vmem:[%s2] sm:$0x3]
    %v297 = vlaneseq
    %v298 = vshrl.u32 %v297, 7
    %v299 = vsub.s32 0, %v298
    %v300 = vrot.slane %v295, %v299
    %v301 = vlaneseq
    %v302 = vshrl.u32 %v301, 7
    %v303 = vsub.s32 1, %v302
    %v304 = vrot.slane %v295, %v303
    %v311 = vcombine.high %v35, %v35
    %v312 = vcombine.high %v36, %v36
    %v313 = vcombine.high %v37, %v37
    %v314 = vcombine.high %v38, %v38
    %319 = vmatprep.subr.mxu0 %v70
    %320 = vmatpush1.msra.mxu0 %v69
    %321 = vmatprep.subr.mxu0 %v68
    %322 = vmatpush1.msra.mxu0 %v67
    %323 = vmatprep.subr.mxu0 %v66
    %324 = vmatpush1.msra.mxu0 %v65
    %325 = vmatprep.subr.mxu0 %v64
    %326 = vmatpush1.msra.mxu0 %v63
    %327 = vmatprep.subr.mxu0 %v62
    %328 = vmatpush1.msra.mxu0 %v61
    %329 = vmatprep.subr.mxu0 %v60
    %330 = vmatpush1.msra.mxu0 %v59
    %331 = vmatprep.subr.mxu0 %v58
    %332 = vmatpush1.msra.mxu0 %v57
    %333 = vmatprep.subr.mxu0 %v56
    %334 = vmatpush1.msra.mxu0 %v55
    %335 = vmatprep.subr.mxu0 %v54
    %336 = vmatpush1.msra.mxu0 %v53
    %337 = vmatprep.subr.mxu0 %v52
    %338 = vmatpush1.msra.mxu0 %v51
    %339 = vmatprep.subr.mxu0 %v50
    %340 = vmatpush1.msra.mxu0 %v49
    %341 = vmatprep.subr.mxu0 %v48
    %342 = vmatpush1.msra.mxu0 %v47
    %343 = vmatprep.subr.mxu0 %v46
    %344 = vmatpush1.msra.mxu0 %v45
    %345 = vmatprep.subr.mxu0 %v44
    %346 = vmatpush1.msra.mxu0 %v43
    %347 = vmatprep.subr.mxu0 %v42
    %348 = vmatpush1.msra.mxu0 %v41
    %349 = vmatprep.subr.mxu0 %v40
    %350 = vmatpush1.msra.mxu0 %v39
    %351 = vmatprep.subr.mxu0 %v102
    %352 = vmatpush2.msra.mxu0 %v101
    %353 = vmatprep.subr.mxu0 %v100
    %354 = vmatpush2.msra.mxu0 %v99
    %355 = vmatprep.subr.mxu0 %v98
    %356 = vmatpush2.msra.mxu0 %v97
    %357 = vmatprep.subr.mxu0 %v96
    %358 = vmatpush2.msra.mxu0 %v95
    %359 = vmatprep.subr.mxu0 %v94
    %360 = vmatpush2.msra.mxu0 %v93
    %361 = vmatprep.subr.mxu0 %v92
    %362 = vmatpush2.msra.mxu0 %v91
    %363 = vmatprep.subr.mxu0 %v90
    %364 = vmatpush2.msra.mxu0 %v89
    %365 = vmatprep.subr.mxu0 %v88
    %366 = vmatpush2.msra.mxu0 %v87
    %367 = vmatprep.subr.mxu0 %v86
    %368 = vmatpush2.msra.mxu0 %v85
    %369 = vmatprep.subr.mxu0 %v84
    %370 = vmatpush2.msra.mxu0 %v83
    %371 = vmatprep.subr.mxu0 %v82
    %372 = vmatpush2.msra.mxu0 %v81
    %373 = vmatprep.subr.mxu0 %v80
    %374 = vmatpush2.msra.mxu0 %v79
    %375 = vmatprep.subr.mxu0 %v78
    %376 = vmatpush2.msra.mxu0 %v77
    %377 = vmatprep.subr.mxu0 %v76
    %378 = vmatpush2.msra.mxu0 %v75
    %379 = vmatprep.subr.mxu0 %v74
    %380 = vmatpush2.msra.mxu0 %v73
    %381 = vmatprep.subr.mxu0 %v72
    %382 = vmatpush2.msra.mxu0 %v71
    %383 = vmatprep.mubr.f32.mxu0 %v311
    %384 = vmatmul.mubr.f32.gmra.mxu0 %v35
    %v385 = vpop.f32.mrf.mxu0
    %v386 = vadd.f32 %v300, %v385
    %v387 = vpop.f32.mrf.mxu0
    %v388 = vadd.f32 %v304, %v387
    %389 = vdwg.mxu0
    %390 = vmatprep.subr.mxu0 %v134
    %391 = vmatpush1.msra.mxu0 %v133
    %392 = vmatprep.subr.mxu0 %v132
    %393 = vmatpush1.msra.mxu0 %v131
    %394 = vmatprep.subr.mxu0 %v130
    %395 = vmatpush1.msra.mxu0 %v129
    %396 = vmatprep.subr.mxu0 %v128
    %397 = vmatpush1.msra.mxu0 %v127
    %398 = vmatprep.subr.mxu0 %v126
    %399 = vmatpush1.msra.mxu0 %v125
    %400 = vmatprep.subr.mxu0 %v124
    %401 = vmatpush1.msra.mxu0 %v123
    %402 = vmatprep.subr.mxu0 %v122
    %403 = vmatpush1.msra.mxu0 %v121
    %404 = vmatprep.subr.mxu0 %v120
    %405 = vmatpush1.msra.mxu0 %v119
    %406 = vmatprep.subr.mxu0 %v118
    %407 = vmatpush1.msra.mxu0 %v117
    %408 = vmatprep.subr.mxu0 %v116
    %409 = vmatpush1.msra.mxu0 %v115
    %410 = vmatprep.subr.mxu0 %v114
    %411 = vmatpush1.msra.mxu0 %v113
    %412 = vmatprep.subr.mxu0 %v112
    %413 = vmatpush1.msra.mxu0 %v111
    %414 = vmatprep.subr.mxu0 %v110
    %415 = vmatpush1.msra.mxu0 %v109
    %416 = vmatprep.subr.mxu0 %v108
    %417 = vmatpush1.msra.mxu0 %v107
    %418 = vmatprep.subr.mxu0 %v106
    %419 = vmatpush1.msra.mxu0 %v105
    %420 = vmatprep.subr.mxu0 %v104
    %421 = vmatpush1.msra.mxu0 %v103
    %422 = vmatprep.subr.mxu0 %v166
    %423 = vmatpush2.msra.mxu0 %v165
    %424 = vmatprep.subr.mxu0 %v164
    %425 = vmatpush2.msra.mxu0 %v163
    %426 = vmatprep.subr.mxu0 %v162
    %427 = vmatpush2.msra.mxu0 %v161
    %428 = vmatprep.subr.mxu0 %v160
    %429 = vmatpush2.msra.mxu0 %v159
    %430 = vmatprep.subr.mxu0 %v158
    %431 = vmatpush2.msra.mxu0 %v157
    %432 = vmatprep.subr.mxu0 %v156
    %433 = vmatpush2.msra.mxu0 %v155
    %434 = vmatprep.subr.mxu0 %v154
    %435 = vmatpush2.msra.mxu0 %v153
    %436 = vmatprep.subr.mxu0 %v152
    %437 = vmatpush2.msra.mxu0 %v151
    %438 = vmatprep.subr.mxu0 %v150
    %439 = vmatpush2.msra.mxu0 %v149
    %440 = vmatprep.subr.mxu0 %v148
    %441 = vmatpush2.msra.mxu0 %v147
    %442 = vmatprep.subr.mxu0 %v146
    %443 = vmatpush2.msra.mxu0 %v145
    %444 = vmatprep.subr.mxu0 %v144
    %445 = vmatpush2.msra.mxu0 %v143
    %446 = vmatprep.subr.mxu0 %v142
    %447 = vmatpush2.msra.mxu0 %v141
    %448 = vmatprep.subr.mxu0 %v140
    %449 = vmatpush2.msra.mxu0 %v139
    %450 = vmatprep.subr.mxu0 %v138
    %451 = vmatpush2.msra.mxu0 %v137
    %452 = vmatprep.subr.mxu0 %v136
    %453 = vmatpush2.msra.mxu0 %v135
    %454 = vmatprep.mubr.f32.mxu0 %v312
    %455 = vmatmul.mubr.f32.gmra.mxu0 %v36
    %v456 = vpop.f32.mrf.mxu0
    %v457 = vadd.f32 %v386, %v456
    %v458 = vpop.f32.mrf.mxu0
    %v459 = vadd.f32 %v388, %v458
    %460 = vdwg.mxu0
    %461 = vmatprep.subr.mxu0 %v198
    %462 = vmatpush1.msra.mxu0 %v197
    %463 = vmatprep.subr.mxu0 %v196
    %464 = vmatpush1.msra.mxu0 %v195
    %465 = vmatprep.subr.mxu0 %v194
    %466 = vmatpush1.msra.mxu0 %v193
    %467 = vmatprep.subr.mxu0 %v192
    %468 = vmatpush1.msra.mxu0 %v191
    %469 = vmatprep.subr.mxu0 %v190
    %470 = vmatpush1.msra.mxu0 %v189
    %471 = vmatprep.subr.mxu0 %v188
    %472 = vmatpush1.msra.mxu0 %v187
    %473 = vmatprep.subr.mxu0 %v186
    %474 = vmatpush1.msra.mxu0 %v185
    %475 = vmatprep.subr.mxu0 %v184
    %476 = vmatpush1.msra.mxu0 %v183
    %477 = vmatprep.subr.mxu0 %v182
    %478 = vmatpush1.msra.mxu0 %v181
    %479 = vmatprep.subr.mxu0 %v180
    %480 = vmatpush1.msra.mxu0 %v179
    %481 = vmatprep.subr.mxu0 %v178
    %482 = vmatpush1.msra.mxu0 %v177
    %483 = vmatprep.subr.mxu0 %v176
    %484 = vmatpush1.msra.mxu0 %v175
    %485 = vmatprep.subr.mxu0 %v174
    %486 = vmatpush1.msra.mxu0 %v173
    %487 = vmatprep.subr.mxu0 %v172
    %488 = vmatpush1.msra.mxu0 %v171
    %489 = vmatprep.subr.mxu0 %v170
    %490 = vmatpush1.msra.mxu0 %v169
    %491 = vmatprep.subr.mxu0 %v168
    %492 = vmatpush1.msra.mxu0 %v167
    %493 = vmatprep.subr.mxu0 %v230
    %494 = vmatpush2.msra.mxu0 %v229
    %495 = vmatprep.subr.mxu0 %v228
    %496 = vmatpush2.msra.mxu0 %v227
    %497 = vmatprep.subr.mxu0 %v226
    %498 = vmatpush2.msra.mxu0 %v225
    %499 = vmatprep.subr.mxu0 %v224
    %500 = vmatpush2.msra.mxu0 %v223
    %501 = vmatprep.subr.mxu0 %v222
    %502 = vmatpush2.msra.mxu0 %v221
    %503 = vmatprep.subr.mxu0 %v220
    %504 = vmatpush2.msra.mxu0 %v219
    %505 = vmatprep.subr.mxu0 %v218
    %506 = vmatpush2.msra.mxu0 %v217
    %507 = vmatprep.subr.mxu0 %v216
    %508 = vmatpush2.msra.mxu0 %v215
    %509 = vmatprep.subr.mxu0 %v214
    %510 = vmatpush2.msra.mxu0 %v213
    %511 = vmatprep.subr.mxu0 %v212
    %512 = vmatpush2.msra.mxu0 %v211
    %513 = vmatprep.subr.mxu0 %v210
    %514 = vmatpush2.msra.mxu0 %v209
    %515 = vmatprep.subr.mxu0 %v208
    %516 = vmatpush2.msra.mxu0 %v207
    %517 = vmatprep.subr.mxu0 %v206
    %518 = vmatpush2.msra.mxu0 %v205
    %519 = vmatprep.subr.mxu0 %v204
    %520 = vmatpush2.msra.mxu0 %v203
    %521 = vmatprep.subr.mxu0 %v202
    %522 = vmatpush2.msra.mxu0 %v201
    %523 = vmatprep.subr.mxu0 %v200
    %524 = vmatpush2.msra.mxu0 %v199
    %525 = vmatprep.mubr.f32.mxu0 %v313
    %526 = vmatmul.mubr.f32.gmra.mxu0 %v37
    %v527 = vpop.f32.mrf.mxu0
    %v528 = vadd.f32 %v457, %v527
    %v529 = vpop.f32.mrf.mxu0
    %v530 = vadd.f32 %v459, %v529
    %531 = vdwg.mxu0
    %532 = vmatprep.subr.mxu0 %v262
    %533 = vmatpush1.msra.mxu0 %v261
    %534 = vmatprep.subr.mxu0 %v260
    %535 = vmatpush1.msra.mxu0 %v259
    %536 = vmatprep.subr.mxu0 %v258
    %537 = vmatpush1.msra.mxu0 %v257
    %538 = vmatprep.subr.mxu0 %v256
    %539 = vmatpush1.msra.mxu0 %v255
    %540 = vmatprep.subr.mxu0 %v254
    %541 = vmatpush1.msra.mxu0 %v253
    %542 = vmatprep.subr.mxu0 %v252
    %543 = vmatpush1.msra.mxu0 %v251
    %544 = vmatprep.subr.mxu0 %v250
    %545 = vmatpush1.msra.mxu0 %v249
    %546 = vmatprep.subr.mxu0 %v248
    %547 = vmatpush1.msra.mxu0 %v247
    %548 = vmatprep.subr.mxu0 %v246
    %549 = vmatpush1.msra.mxu0 %v245
    %550 = vmatprep.subr.mxu0 %v244
    %551 = vmatpush1.msra.mxu0 %v243
    %552 = vmatprep.subr.mxu0 %v242
    %553 = vmatpush1.msra.mxu0 %v241
    %554 = vmatprep.subr.mxu0 %v240
    %555 = vmatpush1.msra.mxu0 %v239
    %556 = vmatprep.subr.mxu0 %v238
    %557 = vmatpush1.msra.mxu0 %v237
    %558 = vmatprep.subr.mxu0 %v236
    %559 = vmatpush1.msra.mxu0 %v235
    %560 = vmatprep.subr.mxu0 %v234
    %561 = vmatpush1.msra.mxu0 %v233
    %562 = vmatprep.subr.mxu0 %v232
    %563 = vmatpush1.msra.mxu0 %v231
    %564 = vmatprep.subr.mxu0 %v294
    %565 = vmatpush2.msra.mxu0 %v293
    %566 = vmatprep.subr.mxu0 %v292
    %567 = vmatpush2.msra.mxu0 %v291
    %568 = vmatprep.subr.mxu0 %v290
    %569 = vmatpush2.msra.mxu0 %v289
    %570 = vmatprep.subr.mxu0 %v288
    %571 = vmatpush2.msra.mxu0 %v287
    %572 = vmatprep.subr.mxu0 %v286
    %573 = vmatpush2.msra.mxu0 %v285
    %574 = vmatprep.subr.mxu0 %v284
    %575 = vmatpush2.msra.mxu0 %v283
    %576 = vmatprep.subr.mxu0 %v282
    %577 = vmatpush2.msra.mxu0 %v281
    %578 = vmatprep.subr.mxu0 %v280
    %579 = vmatpush2.msra.mxu0 %v279
    %580 = vmatprep.subr.mxu0 %v278
    %581 = vmatpush2.msra.mxu0 %v277
    %582 = vmatprep.subr.mxu0 %v276
    %583 = vmatpush2.msra.mxu0 %v275
    %584 = vmatprep.subr.mxu0 %v274
    %585 = vmatpush2.msra.mxu0 %v273
    %586 = vmatprep.subr.mxu0 %v272
    %587 = vmatpush2.msra.mxu0 %v271
    %588 = vmatprep.subr.mxu0 %v270
    %589 = vmatpush2.msra.mxu0 %v269
    %590 = vmatprep.subr.mxu0 %v268
    %591 = vmatpush2.msra.mxu0 %v267
    %592 = vmatprep.subr.mxu0 %v266
    %593 = vmatpush2.msra.mxu0 %v265
    %594 = vmatprep.subr.mxu0 %v264
    %595 = vmatpush2.msra.mxu0 %v263
    %596 = vmatprep.mubr.f32.mxu0 %v314
    %597 = vmatmul.mubr.f32.gmra.mxu0 %v38
    %v598 = vpop.f32.mrf.mxu0
    %v599 = vadd.f32 %v528, %v598
    %v600 = vpop.f32.mrf.mxu0
    %v601 = vadd.f32 %v530, %v600
    %602 = vdwg.mxu0
    %v603 = vld [vmem:[%s3] sm:$0xff]
    %v604 = vld [vmem:[%s3 + $0x8] sm:$0xff]
    %v605 = vld [vmem:[%s3 + $0x10] sm:$0xff]
    %v606 = vld [vmem:[%s3 + $0x18] sm:$0xff]
    %v607 = vld [vmem:[%s3 + $0x20] sm:$0xff]
    %v608 = vld [vmem:[%s3 + $0x28] sm:$0xff]
    %v609 = vld [vmem:[%s3 + $0x30] sm:$0xff]
    %v610 = vld [vmem:[%s3 + $0x38] sm:$0xff]
    %v611 = vld [vmem:[%s3 + $0x40] sm:$0xff]
    %v612 = vld [vmem:[%s3 + $0x48] sm:$0xff]
    %v613 = vld [vmem:[%s3 + $0x50] sm:$0xff]
    %v614 = vld [vmem:[%s3 + $0x58] sm:$0xff]
    %v615 = vld [vmem:[%s3 + $0x60] sm:$0xff]
    %v616 = vld [vmem:[%s3 + $0x68] sm:$0xff]
    %v617 = vld [vmem:[%s3 + $0x70] sm:$0xff]
    %v618 = vld [vmem:[%s3 + $0x78] sm:$0xff]
    %v619 = vld [vmem:[%s3 + $0x80] sm:$0xff]
    %v620 = vld [vmem:[%s3 + $0x88] sm:$0xff]
    %v621 = vld [vmem:[%s3 + $0x90] sm:$0xff]
    %v622 = vld [vmem:[%s3 + $0x98] sm:$0xff]
    %v623 = vld [vmem:[%s3 + $0xa0] sm:$0xff]
    %v624 = vld [vmem:[%s3 + $0xa8] sm:$0xff]
    %v625 = vld [vmem:[%s3 + $0xb0] sm:$0xff]
    %v626 = vld [vmem:[%s3 + $0xb8] sm:$0xff]
    %v627 = vld [vmem:[%s3 + $0xc0] sm:$0xff]
    %v628 = vld [vmem:[%s3 + $0xc8] sm:$0xff]
    %v629 = vld [vmem:[%s3 + $0xd0] sm:$0xff]
    %v630 = vld [vmem:[%s3 + $0xd8] sm:$0xff]
    %v631 = vld [vmem:[%s3 + $0xe0] sm:$0xff]
    %v632 = vld [vmem:[%s3 + $0xe8] sm:$0xff]
    %v633 = vld [vmem:[%s3 + $0xf0] sm:$0xff]
    %v634 = vld [vmem:[%s3 + $0xf8] sm:$0xff]
    %v635 = vld [vmem:[%s4] sm:$0xff]
    %v636 = vld [vmem:[%s4 + $0x8] sm:$0xff]
    %v637 = vld [vmem:[%s4 + $0x10] sm:$0xff]
    %v638 = vld [vmem:[%s4 + $0x18] sm:$0xff]
    %v639 = vmul.f32 %v599, %v599
    %v640 = vmul.f32 %v601, %v601
    %641 = vmatprep.subr.mxu0 0.0
    %642 = vmatpush1.msra.mxu0 %v618
    %643 = vmatprep.subr.mxu0 0.0
    %644 = vmatpush1.msra.mxu0 %v617
    %645 = vmatprep.subr.mxu0 0.0
    %646 = vmatpush1.msra.mxu0 %v616
    %647 = vmatprep.subr.mxu0 0.0
    %648 = vmatpush1.msra.mxu0 %v615
    %649 = vmatprep.subr.mxu0 0.0
    %650 = vmatpush1.msra.mxu0 %v614
    %651 = vmatprep.subr.mxu0 0.0
    %652 = vmatpush1.msra.mxu0 %v613
    %653 = vmatprep.subr.mxu0 0.0
    %654 = vmatpush1.msra.mxu0 %v612
    %655 = vmatprep.subr.mxu0 0.0
    %656 = vmatpush1.msra.mxu0 %v611
    %657 = vmatprep.subr.mxu0 0.0
    %658 = vmatpush1.msra.mxu0 %v610
    %659 = vmatprep.subr.mxu0 0.0
    %660 = vmatpush1.msra.mxu0 %v609
    %661 = vmatprep.subr.mxu0 0.0
    %662 = vmatpush1.msra.mxu0 %v608
    %663 = vmatprep.subr.mxu0 0.0
    %664 = vmatpush1.msra.mxu0 %v607
    %665 = vmatprep.subr.mxu0 0.0
    %666 = vmatpush1.msra.mxu0 %v606
    %667 = vmatprep.subr.mxu0 0.0
    %668 = vmatpush1.msra.mxu0 %v605
    %669 = vmatprep.subr.mxu0 0.0
    %670 = vmatpush1.msra.mxu0 %v604
    %671 = vmatprep.subr.mxu0 0.0
    %672 = vmatpush1.msra.mxu0 %v603
    %673 = vmatprep.subr.mxu0 0.0
    %674 = vmatpush2.msra.mxu0 %v634
    %675 = vmatprep.subr.mxu0 0.0
    %676 = vmatpush2.msra.mxu0 %v633
    %677 = vmatprep.subr.mxu0 0.0
    %678 = vmatpush2.msra.mxu0 %v632
    %679 = vmatprep.subr.mxu0 0.0
    %680 = vmatpush2.msra.mxu0 %v631
    %681 = vmatprep.subr.mxu0 0.0
    %682 = vmatpush2.msra.mxu0 %v630
    %683 = vmatprep.subr.mxu0 0.0
    %684 = vmatpush2.msra.mxu0 %v629
    %685 = vmatprep.subr.mxu0 0.0
    %686 = vmatpush2.msra.mxu0 %v628
    %687 = vmatprep.subr.mxu0 0.0
    %688 = vmatpush2.msra.mxu0 %v627
    %689 = vmatprep.subr.mxu0 0.0
    %690 = vmatpush2.msra.mxu0 %v626
    %691 = vmatprep.subr.mxu0 0.0
    %692 = vmatpush2.msra.mxu0 %v625
    %693 = vmatprep.subr.mxu0 0.0
    %694 = vmatpush2.msra.mxu0 %v624
    %695 = vmatprep.subr.mxu0 0.0
    %696 = vmatpush2.msra.mxu0 %v623
    %697 = vmatprep.subr.mxu0 0.0
    %698 = vmatpush2.msra.mxu0 %v622
    %699 = vmatprep.subr.mxu0 0.0
    %700 = vmatpush2.msra.mxu0 %v621
    %701 = vmatprep.subr.mxu0 0.0
    %702 = vmatpush2.msra.mxu0 %v620
    %703 = vmatprep.subr.mxu0 0.0
    %704 = vmatpush2.msra.mxu0 %v619
    %705 = vmatprep.mubr.f32.mxu0 %v640
    %706 = vmatmul.mubr.f32.gmra.mxu0 %v639
    %v707 = vpop.f32.mrf.mxu0
    %v708 = vadd.f32 0.0, %v707
    %v709 = vpop.f32.mrf.mxu0
    %710 = vdwg.mxu0
    %vm711 = vcmask 130048
    %v713 = vsel %vm711, %v708, 0
    %715 = vmatprep.subr.mxu0 0.0
    %716 = vmatpush1.msra.mxu0 0.0
    %717 = vmatprep.subr.mxu0 0.0
    %718 = vmatpush1.msra.mxu0 0.0
    %719 = vmatprep.subr.mxu0 0.0
    %720 = vmatpush1.msra.mxu0 0.0
    %721 = vmatprep.subr.mxu0 0.0
    %722 = vmatpush1.msra.mxu0 0.0
    %723 = vmatprep.subr.mxu0 0.0
    %724 = vmatpush1.msra.mxu0 0.0
    %725 = vmatprep.subr.mxu0 0.0
    %726 = vmatpush1.msra.mxu0 0.0
    %727 = vmatprep.subr.mxu0 0.0
    %728 = vmatpush1.msra.mxu0 0.0
    %729 = vmatprep.subr.mxu0 0.0
    %730 = vmatpush1.msra.mxu0 0.0
    %731 = vmatprep.subr.mxu0 0.0
    %732 = vmatpush1.msra.mxu0 0.0
    %733 = vmatprep.subr.mxu0 0.0
    %734 = vmatpush1.msra.mxu0 0.0
    %735 = vmatprep.subr.mxu0 0.0
    %736 = vmatpush1.msra.mxu0 0.0
    %737 = vmatprep.subr.mxu0 0.0
    %738 = vmatpush1.msra.mxu0 0.0
    %739 = vmatprep.subr.mxu0 0.0
    %740 = vmatpush1.msra.mxu0 0.0
    %741 = vmatprep.subr.mxu0 0.0
    %742 = vmatpush1.msra.mxu0 0.0
    %743 = vmatprep.subr.mxu0 %v638
    %744 = vmatpush1.msra.mxu0 %v637
    %745 = vmatprep.subr.mxu0 %v636
    %746 = vmatpush1.msra.mxu0 %v635
    %747 = vmatprep.subr.mxu0 0.0
    %748 = vmatpush2.msra.mxu0 0.0
    %749 = vmatprep.subr.mxu0 0.0
    %750 = vmatpush2.msra.mxu0 0.0
    %751 = vmatprep.subr.mxu0 0.0
    %752 = vmatpush2.msra.mxu0 0.0
    %753 = vmatprep.subr.mxu0 0.0
    %754 = vmatpush2.msra.mxu0 0.0
    %755 = vmatprep.subr.mxu0 0.0
    %756 = vmatpush2.msra.mxu0 0.0
    %757 = vmatprep.subr.mxu0 0.0
    %758 = vmatpush2.msra.mxu0 0.0
    %759 = vmatprep.subr.mxu0 0.0
    %760 = vmatpush2.msra.mxu0 0.0
    %761 = vmatprep.subr.mxu0 0.0
    %762 = vmatpush2.msra.mxu0 0.0
    %763 = vmatprep.subr.mxu0 0.0
    %764 = vmatpush2.msra.mxu0 0.0
    %765 = vmatprep.subr.mxu0 0.0
    %766 = vmatpush2.msra.mxu0 0.0
    %767 = vmatprep.subr.mxu0 0.0
    %768 = vmatpush2.msra.mxu0 0.0
    %769 = vmatprep.subr.mxu0 0.0
    %770 = vmatpush2.msra.mxu0 0.0
    %771 = vmatprep.subr.mxu0 0.0
    %772 = vmatpush2.msra.mxu0 0.0
    %773 = vmatprep.subr.mxu0 0.0
    %774 = vmatpush2.msra.mxu0 0.0
    %775 = vmatprep.subr.mxu0 0.0
    %776 = vmatpush2.msra.mxu0 0.0
    %777 = vmatprep.subr.mxu0 0.0
    %778 = vmatpush2.msra.mxu0 0.0
    %779 = vmatprep.mubr.f32.mxu0 0.0
    %780 = vmatmul.mubr.f32.gmra.mxu0 %v713
    %v781 = vpop.f32.mrf.mxu0
    %v782 = vadd.f32 0.0, %v781
    %v783 = vpop.f32.mrf.mxu0
    %v784 = vadd.f32 0.0, %v783
    %785 = vdwg.mxu0
    %v786 = vrsqrt.pop %v782
    %v787 = vrsqrt.pop %v784
    %v788 = vmul.f32 %v599, %v786
    %v789 = vmul.f32 %v601, %v787
    %v792 = vcombine.low %v788, %v789
    %794 = vst [vmem:[#allocation5] sm:$0xff] %v792
    // Predicated region
    $region26: #{tpu_custom_call.1} parent=1 // pred_check
      _
    $region27: #{tpu_custom_call.1} parent=1 // pred_check_branch
      %796 = sbr.rel (0) target = $region29
    $region28: #{tpu_custom_call.1} parent=1 // pred_region
      %s798 = ssub.s32 128, 128
      %799 = vsyncadd [#allocation4], %s798
      %s801 = sshll.u32 [#allocation5], 4
      %s802 = int_to_ptr.vmem [resolvable:$true] %s801
      %804 = dma.vmem_to_hbm [thread:$0]  %s802, 128, %s5, [#allocation4]
    $region29: #{tpu_custom_call.1} parent=1 // pred_fallthru
      _
    // Predicated region
    $region30: #{tpu_custom_call.1} parent=1 // pred_check
      _
    $region31: #{tpu_custom_call.1} parent=1 // pred_check_branch
      %806 = sbr.rel (0) target = $region33
    $region32: #{tpu_custom_call.1} parent=1 // pred_region
      %807 = dma.done [#allocation4], 128
    $region33: #{tpu_custom_call.1} parent=1 // pred_fallthru
      _
    %808 = vsyncpa [#allocation3], 1
    %809 = vsyncpa [#allocation4], 1

</llo_original>
